<compile_context>
chip_gen: v5e
topology: v5e:2x2
jax: 0.10.0
libtpu: 0.0.40
codegen_flags: <defaults>
</compile_context>

<pallas_src>
import functools

import jax
import jax.numpy as jnp
from jax.experimental import pallas as pl
from jax.experimental.pallas import tpu as pltpu


def _round_up(x, m):
    return (x + m - 1) // m * m


# ------------------------------ fused kernel ------------------------------- #

def cnn_text_fused_kernel(x_ref, wc_ref, bc_ref, fcw_ref, fcb_ref, o_ref, *,
                          Kmax, T_out_pad):
    """All conv branches + bias + ReLU + time max-pool + concat + Linear.

    x_ref  : (B_t, T_in, D)    bf16  zero-padded token embeddings
    wc_ref : (Kmax*D, N_pad)   bf16  fused conv weight (branch i lives in lanes
                                     [i*Co,(i+1)*Co) and tap rows [Kmax-K_i,Kmax))
    bc_ref : (1, N_pad)        f32   fused conv bias (zero in padded lanes)
    fcw_ref: (N_pad, C_pad)    bf16  FC weight (zero rows for padded features)
    fcb_ref: (1, C_pad)        f32   FC bias
    o_ref  : (B_t, C_pad)      f32   lane-dense logit slab
    """
    x = x_ref[...]                                   # (B_t, T_in, D)
    B_t, _, D = x.shape

    # Kmax-tap im2col; T_out_pad % 8 == 0 keeps the reshapes layout-preserving.
    taps = [x[:, k:k + T_out_pad, :].reshape(B_t * T_out_pad, D)
            for k in range(Kmax)]
    lhs = jnp.concatenate(taps, axis=-1)             # (B_t*T_out_pad, Kmax*D)

    # ONE 2D MXU matmul for every branch: M = B_t*T_out_pad, N = N_pad.
    acc = jnp.dot(lhs, wc_ref[...],
                  preferred_element_type=jnp.float32)      # (B_t*T_out_pad, N_pad)
    acc = jnp.maximum(acc + bc_ref[...], 0.0)               # bias + ReLU
    acc = acc.reshape(B_t, T_out_pad, -1)
    feat = jnp.max(acc, axis=1)                      # max-pool over time (B_t, N_pad)
    # `feat` already equals concat([branch features], axis=-1) (zero-padded lanes).

    logits = jnp.dot(feat.astype(fcw_ref.dtype), fcw_ref[...],
                     preferred_element_type=jnp.float32) + fcb_ref[...]
    o_ref[...] = logits                              # lane-dense (B_t, C_pad) store


# ------------------------------ forward pass -------------------------------- #

def cnn_text_forward(token_ids, params, kernel_sizes):
    Ks = tuple(kernel_sizes)
    n = len(Ks)
    Kmax = max(Ks)

    # TODO(synk): embedding gather stays in XLA; it could be moved into the
    # kernel via PrefetchScalarGridSpec(num_scalar_prefetch=1) on token_ids
    # with per-row DMA from the HBM embedding table.
    emb = params["embed"][token_ids].astype(jnp.bfloat16)    # (B, L, D) bf16
    B, L, D = emb.shape
    Co = params["conv_w"][0].shape[-1]
    C = params["fc_w"].shape[-1]

    # ---- padded geometry (time axis multiples of 8, feature axes of 128) ----
    T_out = L + Kmax + 1                       # longest branch conv-output length
    T_out_pad = _round_up(T_out, 8)            # extra windows land in zero pad
    T_in = _round_up(T_out_pad + Kmax - 1, 8)  # covers all taps of all windows
    N = n * Co
    N_pad = _round_up(max(N, 128), 128)
    C_pad = _round_up(max(C, 128), 128)

    # Single zero-pad of the sequence (left Kmax, right up to T_in), in bf16.
    x = jnp.pad(emb, ((0, 0), (Kmax, T_in - L - Kmax), (0, 0)))

    # ---- fused conv weight / bias: branch i -> lanes [i*Co,(i+1)*Co),
    #      tap rows [Kmax-K_i, Kmax); zero elsewhere ----
    wc = jnp.zeros((Kmax, D, N_pad), jnp.float32)
    bc = jnp.zeros((1, N_pad), jnp.float32)
    for i, (K, w, b) in enumerate(zip(Ks, params["conv_w"], params["conv_b"])):
        wc = wc.at[Kmax - K:, :, i * Co:(i + 1) * Co].set(w)
        bc = bc.at[:, i * Co:(i + 1) * Co].set(b)
    wc = wc.reshape(Kmax * D, N_pad).astype(jnp.bfloat16)

    fcw = jnp.zeros((N_pad, C_pad), jnp.float32).at[:N, :C].set(params["fc_w"])
    fcw = fcw.astype(jnp.bfloat16)
    fcb = jnp.zeros((1, C_pad), jnp.float32).at[:, :C].set(params["fc_b"])

    # ---- VMEM-budgeted batch tile (v7x: 64 MiB; v5e/v6e: 128 MiB) ----
    vmem_phys = 64 * 1024 * 1024
    try:
        vmem_phys = int(pltpu.get_tpu_info().vmem_capacity_bytes)
    except Exception:
        pass
    vmem_cap = max(32 << 20, min(vmem_phys - (16 << 20), 100 << 20))

    fixed = (2 * Kmax * D * N_pad * 2 + 2 * N_pad * 4          # conv w/b (2 bufs)
             + 2 * N_pad * C_pad * 2 + 2 * C_pad * 4)          # fc w/b (2 bufs)
    per_row = (2 * T_in * D * 2                                # input tile, 2 bufs
               + 2 * T_out_pad * Kmax * D * 2                  # im2col (+ tap slack)
               + T_out_pad * N_pad * 4)                        # f32 conv accumulator
    budget = max(vmem_cap - fixed, 1 << 20)
    B_t = int(budget * 0.6) // max(per_row, 1)
    B_t = (B_t // 8) * 8
    B_t = max(8, min(128, B_t, _round_up(B, 8)))
    B_pad = _round_up(B, B_t)
    if B_pad // B_t < 2 and B_pad >= 16:       # v7x: give both TensorCores a tile
        B_t = max(8, _round_up(B_pad // 2, 8))
        B_pad = _round_up(B, B_t)
    if B_pad != B:
        x = jnp.pad(x, ((0, B_pad - B), (0, 0), (0, 0)))

    vmem_limit = int(max(32 << 20, min(vmem_cap,
                                       int((fixed + B_t * per_row) * 1.5)
                                       + (4 << 20))))

    kernel = functools.partial(cnn_text_fused_kernel,
                               Kmax=Kmax, T_out_pad=T_out_pad)
    out = pl.pallas_call(
        kernel,
        out_shape=jax.ShapeDtypeStruct((B_pad, C_pad), jnp.float32),
        grid=(B_pad // B_t,),
        in_specs=[
            pl.BlockSpec((B_t, T_in, D), lambda i: (i, 0, 0)),
            pl.BlockSpec((Kmax * D, N_pad), lambda i: (0, 0)),
            pl.BlockSpec((1, N_pad), lambda i: (0, 0)),
            pl.BlockSpec((N_pad, C_pad), lambda i: (0, 0)),
            pl.BlockSpec((1, C_pad), lambda i: (0, 0)),
        ],
        out_specs=pl.BlockSpec((B_t, C_pad), lambda i: (i, 0)),
        compiler_params=pltpu.CompilerParams(
            dimension_semantics=("parallel",),
            vmem_limit_bytes=vmem_limit),
    )(x, wc, bc, fcw, fcb)

    # TODO(synk): nn.Dropout is the identity at inference; training-mode random
    # masking and 1/(1-p) scaling are not implemented.
    return out[:B, :C]


# ------------------------- pure-JAX f32 reference --------------------------- #

def cnn_text_reference(token_ids, params, kernel_sizes):
    emb = params["embed"][token_ids]                 # (B, L, D) f32
    B, L, D = emb.shape
    feats = []
    for K, w, b in zip(kernel_sizes, params["conv_w"], params["conv_b"]):
        xp = jnp.pad(emb, ((0, 0), (K, K), (0, 0)))  # F.conv2d padding=(K,0)
        T_out = L + K + 1
        conv = jnp.zeros((B, T_out, w.shape[-1]), jnp.float32)
        for k in range(K):
            conv = conv + jnp.einsum("btd,dc->btc", xp[:, k:k + T_out, :], w[k])
        conv = jnp.maximum(conv + b, 0.0)
        feats.append(conv.max(axis=1))
    feat = jnp.concatenate(feats, axis=-1)
    return feat @ params["fc_w"] + params["fc_b"]


# --------------------------- deterministic params --------------------------- #

def init_params(key, V, D, Co, Ks, C):
    n_keys = 1 + 2 * len(Ks) + 2
    keys = jax.random.split(key, n_keys)
    params = {
        "embed": jax.random.normal(keys[0], (V, D), jnp.float32) * 0.1,
        "conv_w": [],
        "conv_b": [],
    }
    ki = 1
    for K in Ks:
        # PyTorch conv weight is (Co, 1, K, D); stored here as (K, D, Co).
        params["conv_w"].append(
            jax.random.normal(keys[ki], (K, D, Co), jnp.float32) * 0.1)
        params["conv_b"].append(
            jax.random.normal(keys[ki + 1], (1, Co), jnp.float32) * 0.1)
        ki += 2
    # PyTorch fc1 weight is (C, len(Ks)*Co); stored here as (len(Ks)*Co, C).
    params["fc_w"] = jax.random.normal(keys[ki], (len(Ks) * Co, C),
                                       jnp.float32) * 0.1
    params["fc_b"] = jax.random.normal(keys[ki + 1], (1, C), jnp.float32) * 0.1
    return params


# ---------------------------------- main ------------------------------------ #

if __name__ == "__main__":
    # Small, forward-consistent sizes.
    B, L = 2, 8               # batch, sequence length
    V, D = 32, 32             # vocab_size, embed_dim
    Co = 16                   # kernel_num
    Ks = (3, 4, 5)            # kernel_sizes
    C = 4                     # len(class_category)

    key = jax.random.PRNGKey(0)
    k_tok, k_param = jax.random.split(key)
    token_ids = jax.random.randint(k_tok, (B, L), 0, V, dtype=jnp.int32)
    params = init_params(k_param, V, D, Co, Ks, C)

    logit = cnn_text_forward(token_ids, params, Ks)
    jax.block_until_ready(logit)
    assert logit.shape == (B, C), logit.shape

    ref = cnn_text_reference(token_ids, params, Ks)
    err = float(jnp.max(jnp.abs(logit - ref)))
    assert jnp.allclose(logit, ref, atol=2e-2, rtol=2e-2), err

    print("KERNEL_OK")
</pallas_src>

<mosaic_0001>
module attributes {stable_mosaic.version = 11 : i64} {
  func.func @cnn_text_fused_kernel(%arg0: i32, %arg1: memref<8x24x32xbf16, #tpu.memory_space<vmem>>, %arg2: memref<160x128xbf16, #tpu.memory_space<vmem>>, %arg3: memref<1x128xf32, #tpu.memory_space<vmem>>, %arg4: memref<128x128xbf16, #tpu.memory_space<vmem>>, %arg5: memref<1x128xf32, #tpu.memory_space<vmem>>, %arg6: memref<8x128xf32, #tpu.memory_space<vmem>>) attributes {dimension_semantics = [#tpu.dimension_semantics<parallel>], iteration_bounds = array<i64: 1>, scalar_prefetch = 0 : i64, scratch_operands = 0 : i64, tpu.core_type = #tpu.core_type<tc>, window_params = [{transform_indices = @transform_0, window_bounds = array<i64: 8, 24, 32>}, {pipeline_mode = #tpu.pipeline_mode<synchronous>, transform_indices = @transform_1, window_bounds = array<i64: 160, 128>}, {pipeline_mode = #tpu.pipeline_mode<synchronous>, transform_indices = @transform_2, window_bounds = array<i64: 1, 128>}, {pipeline_mode = #tpu.pipeline_mode<synchronous>, transform_indices = @transform_3, window_bounds = array<i64: 128, 128>}, {pipeline_mode = #tpu.pipeline_mode<synchronous>, transform_indices = @transform_4, window_bounds = array<i64: 1, 128>}, {transform_indices = @transform_5, window_bounds = array<i64: 8, 128>}]} {
    %c0 = arith.constant 0 : index
    %c0_0 = arith.constant 0 : index
    %c0_1 = arith.constant 0 : index
    %0 = vector.load %arg1[%c0, %c0_0, %c0_1] : memref<8x24x32xbf16, #tpu.memory_space<vmem>>, vector<8x24x32xbf16>
    %1 = vector.extract_strided_slice %0 {offsets = [0, 0, 0], sizes = [8, 16, 32], strides = [1, 1, 1]} : vector<8x24x32xbf16> to vector<8x16x32xbf16>
    %2 = vector.shape_cast %1 : vector<8x16x32xbf16> to vector<128x32xbf16>
    %3 = vector.extract_strided_slice %0 {offsets = [0, 1, 0], sizes = [8, 16, 32], strides = [1, 1, 1]} : vector<8x24x32xbf16> to vector<8x16x32xbf16>
    %4 = vector.shape_cast %3 : vector<8x16x32xbf16> to vector<128x32xbf16>
    %5 = vector.extract_strided_slice %0 {offsets = [0, 2, 0], sizes = [8, 16, 32], strides = [1, 1, 1]} : vector<8x24x32xbf16> to vector<8x16x32xbf16>
    %6 = vector.shape_cast %5 : vector<8x16x32xbf16> to vector<128x32xbf16>
    %7 = vector.extract_strided_slice %0 {offsets = [0, 3, 0], sizes = [8, 16, 32], strides = [1, 1, 1]} : vector<8x24x32xbf16> to vector<8x16x32xbf16>
    %8 = vector.shape_cast %7 : vector<8x16x32xbf16> to vector<128x32xbf16>
    %9 = vector.extract_strided_slice %0 {offsets = [0, 4, 0], sizes = [8, 16, 32], strides = [1, 1, 1]} : vector<8x24x32xbf16> to vector<8x16x32xbf16>
    %10 = vector.shape_cast %9 : vector<8x16x32xbf16> to vector<128x32xbf16>
    %11 = tpu.concatenate %2, %4, %6, %8, %10 in 1 : vector<128x32xbf16>, vector<128x32xbf16>, vector<128x32xbf16>, vector<128x32xbf16>, vector<128x32xbf16> -> vector<128x160xbf16>
    %c0_2 = arith.constant 0 : index
    %c0_3 = arith.constant 0 : index
    %12 = vector.load %arg2[%c0_2, %c0_3] : memref<160x128xbf16, #tpu.memory_space<vmem>>, vector<160x128xbf16>
    %cst = arith.constant dense<0.000000e+00> : vector<128x128xf32>
    %13 = tpu.matmul %11, %12, %cst {dimension_numbers = #tpu.dot_dimension_numbers<[1], [0], [0], [1], [0, 0, 1, 1], [], []>} : vector<128x160xbf16>, vector<160x128xbf16>, vector<128x128xf32> -> vector<128x128xf32>
    %c0_4 = arith.constant 0 : index
    %c0_5 = arith.constant 0 : index
    %14 = vector.load %arg3[%c0_4, %c0_5] : memref<1x128xf32, #tpu.memory_space<vmem>>, vector<1x128xf32>
    %15 = vector.broadcast %14 : vector<1x128xf32> to vector<128x128xf32>
    %16 = arith.addf %13, %15 : vector<128x128xf32>
    %cst_6 = arith.constant 0.000000e+00 : f32
    %17 = vector.broadcast %cst_6 : f32 to vector<128x128xf32>
    %18 = arith.maximumf %16, %17 : vector<128x128xf32>
    %19 = vector.shape_cast %18 : vector<128x128xf32> to vector<8x16x128xf32>
    %cst_7 = arith.constant dense<0xFF800000> : vector<8x128xf32>
    %20 = vector.multi_reduction <maximumf>, %19, %cst_7 [1] : vector<8x16x128xf32> to vector<8x128xf32>
    %21 = arith.truncf %20 : vector<8x128xf32> to vector<8x128xbf16>
    %c0_8 = arith.constant 0 : index
    %c0_9 = arith.constant 0 : index
    %22 = vector.load %arg4[%c0_8, %c0_9] : memref<128x128xbf16, #tpu.memory_space<vmem>>, vector<128x128xbf16>
    %cst_10 = arith.constant dense<0.000000e+00> : vector<8x128xf32>
    %23 = tpu.matmul %21, %22, %cst_10 {dimension_numbers = #tpu.dot_dimension_numbers<[1], [0], [0], [1], [0, 0, 1, 1], [], []>} : vector<8x128xbf16>, vector<128x128xbf16>, vector<8x128xf32> -> vector<8x128xf32>
    %c0_11 = arith.constant 0 : index
    %c0_12 = arith.constant 0 : index
    %24 = vector.load %arg5[%c0_11, %c0_12] : memref<1x128xf32, #tpu.memory_space<vmem>>, vector<1x128xf32>
    %25 = vector.broadcast %24 : vector<1x128xf32> to vector<8x128xf32>
    %26 = arith.addf %23, %25 : vector<8x128xf32>
    %c0_13 = arith.constant 0 : index
    %c0_14 = arith.constant 0 : index
    %27 = vector.load %arg6[%c0_13, %c0_14] : memref<8x128xf32, #tpu.memory_space<vmem>>, vector<8x128xf32>
    tpu.vector_store %arg6[%c0_13, %c0_14], %26 {strides = array<i32>} : memref<8x128xf32, #tpu.memory_space<vmem>>, vector<8x128xf32>,
    return
  }
  func.func @transform_0(%arg0: i32) -> (i32, i32, i32) {
    %c0_i32 = arith.constant 0 : i32
    %c0_i32_0 = arith.constant 0 : i32
    %c0_i32_1 = arith.constant 0 : i32
    return %arg0, %c0_i32, %c0_i32_0 : i32, i32, i32
  }
  func.func @transform_1(%arg0: i32) -> (i32, i32) {
    %c0_i32 = arith.constant 0 : i32
    %c0_i32_0 = arith.constant 0 : i32
    %c0_i32_1 = arith.constant 0 : i32
    return %c0_i32, %c0_i32_0 : i32, i32
  }
  func.func @transform_2(%arg0: i32) -> (i32, i32) {
    %c0_i32 = arith.constant 0 : i32
    %c0_i32_0 = arith.constant 0 : i32
    %c0_i32_1 = arith.constant 0 : i32
    return %c0_i32, %c0_i32_0 : i32, i32
  }
  func.func @transform_3(%arg0: i32) -> (i32, i32) {
    %c0_i32 = arith.constant 0 : i32
    %c0_i32_0 = arith.constant 0 : i32
    %c0_i32_1 = arith.constant 0 : i32
    return %c0_i32, %c0_i32_0 : i32, i32
  }
  func.func @transform_4(%arg0: i32) -> (i32, i32) {
    %c0_i32 = arith.constant 0 : i32
    %c0_i32_0 = arith.constant 0 : i32
    %c0_i32_1 = arith.constant 0 : i32
    return %c0_i32, %c0_i32_0 : i32, i32
  }
  func.func @transform_5(%arg0: i32) -> (i32, i32) {
    %c0_i32 = arith.constant 0 : i32
    %c0_i32_0 = arith.constant 0 : i32
    return %arg0, %c0_i32 : i32, i32
  }
}

</mosaic_0001>

<llo_original>
// kernel: tpu_custom_call.1
$region0: #{tpu_custom_call.1}
  #allocation0 [shape = 'u32[]', space=smem, size = 0x4, offset = 0x4, fixed_abs, tag = 'smem constant byte address 0x4 - core index']
  #allocation1 [shape = 'u32[72,128]{1,0:T(1,128)}', space=vmem, size = 0x9000, scoped, tag = 'internal scratch']
  %s0 = inlined_call_operand.hbm [shape: bf16[8,24,32], index: 0, kind: input, shape index: {}]
  %s1 = inlined_call_operand.hbm [shape: bf16[160,128], index: 1, kind: input, shape index: {}]
  %s2 = inlined_call_operand.vmem [shape: f32[1,128], index: 2, kind: input, shape index: {}]
  %s3 = inlined_call_operand.hbm [shape: bf16[128,128], index: 3, kind: input, shape index: {}]
  %s4 = inlined_call_operand.vmem [shape: f32[1,128], index: 4, kind: input, shape index: {}]
  %s5 = inlined_call_operand.hbm [shape: f32[8,128], index: 5, kind: output, shape index: {}]
  %s6 = sld [smem:[#allocation0]]
  $region42: #{tpu_custom_call.1} parent=0
    _
  %s8 = ssub.s32 1, %s6
  %s9 = scalar_select 0, %s8, %s6
  $region1: #{tpu_custom_call.1} parent=0
    #allocation2 [shape = 'u8[49152]{0}', space=vmem, size = 0xc000, scoped, tag = 'input window, operand 0, single buffered']
    #allocation3 [shape = 's32[1]{0}', space=sflag, size = 0x4, scoped, tag = 'scoped memory for tpu_custom_call.1']
    #allocation4 [shape = 's32[1]{0}', space=sflag, size = 0x4, scoped, tag = 'scoped memory for tpu_custom_call.1']
    #allocation5 [shape = 'u8[40960]{0}', space=vmem, size = 0xa000, scoped, tag = 'input window, operand 1, single buffered']
    #allocation6 [shape = 's32[1]{0}', space=sflag, size = 0x4, scoped, tag = 'scoped memory for tpu_custom_call.1']
    #allocation7 [shape = 'u8[32768]{0}', space=vmem, size = 0x8000, scoped, tag = 'input window, operand 3, single buffered']
    #allocation8 [shape = 'u8[4096]{0}', space=vmem, size = 0x1000, scoped, tag = 'output window, operand 0, single buffered']
    %10 = vsyncpa [#allocation3], 0
    %11 = vsyncpa [#allocation6], 0
    %12 = vsyncpa [#allocation4], 0
    // Predicated region
    $region2: #{tpu_custom_call.1} parent=1 // pred_check
      _
    $region3: #{tpu_custom_call.1} parent=1 // pred_check_branch
      %14 = sbr.rel (0) target = $region5
    $region4: #{tpu_custom_call.1} parent=1 // pred_region
      %16 = vsyncadd [#allocation3], 0
      %s17 = sshll.u32 %s0, 4
      %s18 = int_to_ptr.hbm [resolvable:$true] %s17
      %s19 = sshll.u32 [#allocation2], 4
      %s20 = int_to_ptr.vmem [resolvable:$true] %s19
      %25 = dma.hbm_to_vmem [thread:$0]  %s18, 1536, %s20, [#allocation3], 64, 64, 4
    $region5: #{tpu_custom_call.1} parent=1 // pred_fallthru
      _
    // Predicated region
    $region6: #{tpu_custom_call.1} parent=1 // pred_check
      _
    $region7: #{tpu_custom_call.1} parent=1 // pred_check_branch
      %27 = sbr.rel (0) target = $region9
    $region8: #{tpu_custom_call.1} parent=1 // pred_region
      %29 = vsyncadd [#allocation6], 0
      %s30 = sshll.u32 %s1, 4
      %s31 = int_to_ptr.hbm [resolvable:$true] %s30
      %s32 = sshll.u32 [#allocation5], 4
      %s33 = int_to_ptr.vmem [resolvable:$true] %s32
      %38 = dma.hbm_to_vmem [thread:$0]  %s31, 1280, %s33, [#allocation6], 64, 64, 4
    $region9: #{tpu_custom_call.1} parent=1 // pred_fallthru
      _
    // Predicated region
    $region10: #{tpu_custom_call.1} parent=1 // pred_check
      _
    $region11: #{tpu_custom_call.1} parent=1 // pred_check_branch
      %40 = sbr.rel (0) target = $region13
    $region12: #{tpu_custom_call.1} parent=1 // pred_region
      _
    $region13: #{tpu_custom_call.1} parent=1 // pred_fallthru
      _
    // Predicated region
    $region14: #{tpu_custom_call.1} parent=1 // pred_check
      _
    $region15: #{tpu_custom_call.1} parent=1 // pred_check_branch
      %42 = sbr.rel (0) target = $region17
    $region16: #{tpu_custom_call.1} parent=1 // pred_region
      %44 = vsyncadd [#allocation6], 0
      %s45 = sshll.u32 %s3, 4
      %s46 = int_to_ptr.hbm [resolvable:$true] %s45
      %s47 = sshll.u32 [#allocation7], 4
      %s48 = int_to_ptr.vmem [resolvable:$true] %s47
      %53 = dma.hbm_to_vmem [thread:$0]  %s46, 1024, %s48, [#allocation6], 64, 64, 4
    $region17: #{tpu_custom_call.1} parent=1 // pred_fallthru
      _
    // Predicated region
    $region18: #{tpu_custom_call.1} parent=1 // pred_check
      _
    $region19: #{tpu_custom_call.1} parent=1 // pred_check_branch
      %55 = sbr.rel (0) target = $region21
    $region20: #{tpu_custom_call.1} parent=1 // pred_region
      _
    $region21: #{tpu_custom_call.1} parent=1 // pred_fallthru
      _
    // Predicated region
    $region22: #{tpu_custom_call.1} parent=1 // pred_check
      _
    $region23: #{tpu_custom_call.1} parent=1 // pred_check_branch
      %57 = sbr.rel (0) target = $region25
    $region24: #{tpu_custom_call.1} parent=1 // pred_region
      %59 = dma.done [#allocation3], 1536
    $region25: #{tpu_custom_call.1} parent=1 // pred_fallthru
      _
    // Predicated region
    $region26: #{tpu_custom_call.1} parent=1 // pred_check
      _
    $region27: #{tpu_custom_call.1} parent=1 // pred_check_branch
      %61 = sbr.rel (0) target = $region29
    $region28: #{tpu_custom_call.1} parent=1 // pred_region
      %63 = dma.done [#allocation6], 1280
    $region29: #{tpu_custom_call.1} parent=1 // pred_fallthru
      _
    // Predicated region
    $region30: #{tpu_custom_call.1} parent=1 // pred_check
      _
    $region31: #{tpu_custom_call.1} parent=1 // pred_check_branch
      %65 = sbr.rel (0) target = $region33
    $region32: #{tpu_custom_call.1} parent=1 // pred_region
      %67 = dma.done [#allocation6], 1024
    $region33: #{tpu_custom_call.1} parent=1 // pred_fallthru
      _
    %v69 = vld [vmem:[#allocation2] sm:$0xf]
    %v70 = vld [vmem:[#allocation2 + $0x4] sm:$0xf]
    %v71 = vld [vmem:[#allocation2 + $0x8] sm:$0xf]
    %v72 = vld [vmem:[#allocation2 + $0xc] sm:$0xf]
    %v73 = vld [vmem:[#allocation2 + $0x10] sm:$0xf]
    %v74 = vld [vmem:[#allocation2 + $0x14] sm:$0xf]
    %v75 = vld [vmem:[#allocation2 + $0x18] sm:$0xf]
    %v76 = vld [vmem:[#allocation2 + $0x1c] sm:$0xf]
    %v77 = vld [vmem:[#allocation2 + $0x20] sm:$0xf]
    %v78 = vld [vmem:[#allocation2 + $0x24] sm:$0xf]
    %v79 = vld [vmem:[#allocation2 + $0x28] sm:$0xf]
    %v80 = vld [vmem:[#allocation2 + $0x2c] sm:$0xf]
    %v81 = vld [vmem:[#allocation2 + $0x30] sm:$0xf]
    %v82 = vld [vmem:[#allocation2 + $0x34] sm:$0xf]
    %v83 = vld [vmem:[#allocation2 + $0x38] sm:$0xf]
    %v84 = vld [vmem:[#allocation2 + $0x3c] sm:$0xf]
    %v85 = vld [vmem:[#allocation2 + $0x40] sm:$0xf]
    %v86 = vld [vmem:[#allocation2 + $0x44] sm:$0xf]
    %v87 = vld [vmem:[#allocation2 + $0x48] sm:$0xf]
    %v88 = vld [vmem:[#allocation2 + $0x4c] sm:$0xf]
    %v89 = vld [vmem:[#allocation2 + $0x50] sm:$0xf]
    %v90 = vld [vmem:[#allocation2 + $0x54] sm:$0xf]
    %v91 = vld [vmem:[#allocation2 + $0x58] sm:$0xf]
    %v92 = vld [vmem:[#allocation2 + $0x5c] sm:$0xf]
    %vm93 = vsmask.f32 3328
    %vm94 = vsmask.f32 7440
    %vm95 = vmor %vm93, %vm94
    %v97 = vshrl.u32 %v69, 16
    %v99 = vrot.slane %v97, 4
    %v100 = vshll.u32 %v69, 16
    %v102 = vrot.slane %v100, 5
    %v103 = vor.u32 %v99, %v102
    %v104 = vrot.slane %v103, 4
    %v106 = vshll.u32 %v70, 16
    %v108 = vrot.slane %v106, 5
    %v109 = vsel %vm95, %v104, %v108
    %v110 = vshrl.u32 %v70, 16
    %v112 = vrot.slane %v110, 4
    %v113 = vor.u32 %v112, %v108
    %v114 = vrot.slane %v113, 4
    %v116 = vshll.u32 %v71, 16
    %v118 = vrot.slane %v116, 5
    %v119 = vsel %vm95, %v114, %v118
    %v121 = vshrl.u32 %v72, 16
    %v123 = vrot.slane %v121, 4
    %v124 = vshll.u32 %v72, 16
    %v126 = vrot.slane %v124, 5
    %v127 = vor.u32 %v123, %v126
    %v128 = vrot.slane %v127, 4
    %v130 = vshll.u32 %v73, 16
    %v132 = vrot.slane %v130, 5
    %v133 = vsel %vm95, %v128, %v132
    %v134 = vshrl.u32 %v73, 16
    %v136 = vrot.slane %v134, 4
    %v137 = vor.u32 %v136, %v132
    %v138 = vrot.slane %v137, 4
    %v140 = vshll.u32 %v74, 16
    %v142 = vrot.slane %v140, 5
    %v143 = vsel %vm95, %v138, %v142
    %v145 = vshrl.u32 %v75, 16
    %v147 = vrot.slane %v145, 4
    %v148 = vshll.u32 %v75, 16
    %v150 = vrot.slane %v148, 5
    %v151 = vor.u32 %v147, %v150
    %v152 = vrot.slane %v151, 4
    %v154 = vshll.u32 %v76, 16
    %v156 = vrot.slane %v154, 5
    %v157 = vsel %vm95, %v152, %v156
    %v158 = vshrl.u32 %v76, 16
    %v160 = vrot.slane %v158, 4
    %v161 = vor.u32 %v160, %v156
    %v162 = vrot.slane %v161, 4
    %v164 = vshll.u32 %v77, 16
    %v166 = vrot.slane %v164, 5
    %v167 = vsel %vm95, %v162, %v166
    %v169 = vshrl.u32 %v78, 16
    %v171 = vrot.slane %v169, 4
    %v172 = vshll.u32 %v78, 16
    %v174 = vrot.slane %v172, 5
    %v175 = vor.u32 %v171, %v174
    %v176 = vrot.slane %v175, 4
    %v178 = vshll.u32 %v79, 16
    %v180 = vrot.slane %v178, 5
    %v181 = vsel %vm95, %v176, %v180
    %v182 = vshrl.u32 %v79, 16
    %v184 = vrot.slane %v182, 4
    %v185 = vor.u32 %v184, %v180
    %v186 = vrot.slane %v185, 4
    %v188 = vshll.u32 %v80, 16
    %v190 = vrot.slane %v188, 5
    %v191 = vsel %vm95, %v186, %v190
    %v193 = vshrl.u32 %v81, 16
    %v195 = vrot.slane %v193, 4
    %v196 = vshll.u32 %v81, 16
    %v198 = vrot.slane %v196, 5
    %v199 = vor.u32 %v195, %v198
    %v200 = vrot.slane %v199, 4
    %v202 = vshll.u32 %v82, 16
    %v204 = vrot.slane %v202, 5
    %v205 = vsel %vm95, %v200, %v204
    %v206 = vshrl.u32 %v82, 16
    %v208 = vrot.slane %v206, 4
    %v209 = vor.u32 %v208, %v204
    %v210 = vrot.slane %v209, 4
    %v212 = vshll.u32 %v83, 16
    %v214 = vrot.slane %v212, 5
    %v215 = vsel %vm95, %v210, %v214
    %v217 = vshrl.u32 %v84, 16
    %v219 = vrot.slane %v217, 4
    %v220 = vshll.u32 %v84, 16
    %v222 = vrot.slane %v220, 5
    %v223 = vor.u32 %v219, %v222
    %v224 = vrot.slane %v223, 4
    %v226 = vshll.u32 %v85, 16
    %v228 = vrot.slane %v226, 5
    %v229 = vsel %vm95, %v224, %v228
    %v230 = vshrl.u32 %v85, 16
    %v232 = vrot.slane %v230, 4
    %v233 = vor.u32 %v232, %v228
    %v234 = vrot.slane %v233, 4
    %v236 = vshll.u32 %v86, 16
    %v238 = vrot.slane %v236, 5
    %v239 = vsel %vm95, %v234, %v238
    %v241 = vshrl.u32 %v87, 16
    %v243 = vrot.slane %v241, 4
    %v244 = vshll.u32 %v87, 16
    %v246 = vrot.slane %v244, 5
    %v247 = vor.u32 %v243, %v246
    %v248 = vrot.slane %v247, 4
    %v250 = vshll.u32 %v88, 16
    %v252 = vrot.slane %v250, 5
    %v253 = vsel %vm95, %v248, %v252
    %v254 = vshrl.u32 %v88, 16
    %v256 = vrot.slane %v254, 4
    %v257 = vor.u32 %v256, %v252
    %v258 = vrot.slane %v257, 4
    %v260 = vshll.u32 %v89, 16
    %v262 = vrot.slane %v260, 5
    %v263 = vsel %vm95, %v258, %v262
    %v265 = vshrl.u32 %v90, 16
    %v267 = vrot.slane %v265, 4
    %v268 = vshll.u32 %v90, 16
    %v270 = vrot.slane %v268, 5
    %v271 = vor.u32 %v267, %v270
    %v272 = vrot.slane %v271, 4
    %v274 = vshll.u32 %v91, 16
    %v276 = vrot.slane %v274, 5
    %v277 = vsel %vm95, %v272, %v276
    %v278 = vshrl.u32 %v91, 16
    %v280 = vrot.slane %v278, 4
    %v281 = vor.u32 %v280, %v276
    %v282 = vrot.slane %v281, 4
    %v284 = vshll.u32 %v92, 16
    %v286 = vrot.slane %v284, 5
    %v287 = vsel %vm95, %v282, %v286
    %vm312 = vcmask 1042432
    %vm313 = vcmask 1046532
    %vm314 = vmor %vm312, %vm313
    %v315 = vrot.slane %v69, 5
    %v316 = vrot.slane %v315, 4
    %v317 = vrot.slane %v70, 5
    %v318 = vsel %vm314, %v316, %v317
    %v319 = vrot.slane %v317, 4
    %v320 = vrot.slane %v71, 5
    %v321 = vsel %vm314, %v319, %v320
    %v322 = vrot.slane %v72, 5
    %v323 = vrot.slane %v322, 4
    %v324 = vrot.slane %v73, 5
    %v325 = vsel %vm314, %v323, %v324
    %v326 = vrot.slane %v324, 4
    %v327 = vrot.slane %v74, 5
    %v328 = vsel %vm314, %v326, %v327
    %v329 = vrot.slane %v75, 5
    %v330 = vrot.slane %v329, 4
    %v331 = vrot.slane %v76, 5
    %v332 = vsel %vm314, %v330, %v331
    %v333 = vrot.slane %v331, 4
    %v334 = vrot.slane %v77, 5
    %v335 = vsel %vm314, %v333, %v334
    %v336 = vrot.slane %v78, 5
    %v337 = vrot.slane %v336, 4
    %v338 = vrot.slane %v79, 5
    %v339 = vsel %vm314, %v337, %v338
    %v340 = vrot.slane %v338, 4
    %v341 = vrot.slane %v80, 5
    %v342 = vsel %vm314, %v340, %v341
    %v343 = vrot.slane %v81, 5
    %v344 = vrot.slane %v343, 4
    %v345 = vrot.slane %v82, 5
    %v346 = vsel %vm314, %v344, %v345
    %v347 = vrot.slane %v345, 4
    %v348 = vrot.slane %v83, 5
    %v349 = vsel %vm314, %v347, %v348
    %v350 = vrot.slane %v84, 5
    %v351 = vrot.slane %v350, 4
    %v352 = vrot.slane %v85, 5
    %v353 = vsel %vm314, %v351, %v352
    %v354 = vrot.slane %v352, 4
    %v355 = vrot.slane %v86, 5
    %v356 = vsel %vm314, %v354, %v355
    %v357 = vrot.slane %v87, 5
    %v358 = vrot.slane %v357, 4
    %v359 = vrot.slane %v88, 5
    %v360 = vsel %vm314, %v358, %v359
    %v361 = vrot.slane %v359, 4
    %v362 = vrot.slane %v89, 5
    %v363 = vsel %vm314, %v361, %v362
    %v364 = vrot.slane %v90, 5
    %v365 = vrot.slane %v364, 4
    %v366 = vrot.slane %v91, 5
    %v367 = vsel %vm314, %v365, %v366
    %v368 = vrot.slane %v366, 4
    %v369 = vrot.slane %v92, 5
    %v370 = vsel %vm314, %v368, %v369
    %vm371 = vsmask.f32 2304
    %vm372 = vsmask.f32 6416
    %vm373 = vmor %vm371, %vm372
    %v374 = vrot.slane %v97, 5
    %v375 = vrot.slane %v100, 6
    %v376 = vor.u32 %v374, %v375
    %v377 = vrot.slane %v376, 4
    %v378 = vrot.slane %v110, 5
    %v379 = vrot.slane %v106, 6
    %v380 = vor.u32 %v378, %v379
    %v381 = vsel %vm373, %v377, %v380
    %v382 = vrot.slane %v380, 4
    %v383 = vshrl.u32 %v71, 16
    %v385 = vrot.slane %v383, 5
    %v386 = vrot.slane %v116, 6
    %v387 = vor.u32 %v385, %v386
    %v388 = vsel %vm373, %v382, %v387
    %v389 = vrot.slane %v121, 5
    %v390 = vrot.slane %v124, 6
    %v391 = vor.u32 %v389, %v390
    %v392 = vrot.slane %v391, 4
    %v393 = vrot.slane %v134, 5
    %v394 = vrot.slane %v130, 6
    %v395 = vor.u32 %v393, %v394
    %v396 = vsel %vm373, %v392, %v395
    %v397 = vrot.slane %v395, 4
    %v398 = vshrl.u32 %v74, 16
    %v400 = vrot.slane %v398, 5
    %v401 = vrot.slane %v140, 6
    %v402 = vor.u32 %v400, %v401
    %v403 = vsel %vm373, %v397, %v402
    %v404 = vrot.slane %v145, 5
    %v405 = vrot.slane %v148, 6
    %v406 = vor.u32 %v404, %v405
    %v407 = vrot.slane %v406, 4
    %v408 = vrot.slane %v158, 5
    %v409 = vrot.slane %v154, 6
    %v410 = vor.u32 %v408, %v409
    %v411 = vsel %vm373, %v407, %v410
    %v412 = vrot.slane %v410, 4
    %v413 = vshrl.u32 %v77, 16
    %v415 = vrot.slane %v413, 5
    %v416 = vrot.slane %v164, 6
    %v417 = vor.u32 %v415, %v416
    %v418 = vsel %vm373, %v412, %v417
    %v419 = vrot.slane %v169, 5
    %v420 = vrot.slane %v172, 6
    %v421 = vor.u32 %v419, %v420
    %v422 = vrot.slane %v421, 4
    %v423 = vrot.slane %v182, 5
    %v424 = vrot.slane %v178, 6
    %v425 = vor.u32 %v423, %v424
    %v426 = vsel %vm373, %v422, %v425
    %v427 = vrot.slane %v425, 4
    %v428 = vshrl.u32 %v80, 16
    %v430 = vrot.slane %v428, 5
    %v431 = vrot.slane %v188, 6
    %v432 = vor.u32 %v430, %v431
    %v433 = vsel %vm373, %v427, %v432
    %v434 = vrot.slane %v193, 5
    %v435 = vrot.slane %v196, 6
    %v436 = vor.u32 %v434, %v435
    %v437 = vrot.slane %v436, 4
    %v438 = vrot.slane %v206, 5
    %v439 = vrot.slane %v202, 6
    %v440 = vor.u32 %v438, %v439
    %v441 = vsel %vm373, %v437, %v440
    %v442 = vrot.slane %v440, 4
    %v443 = vshrl.u32 %v83, 16
    %v445 = vrot.slane %v443, 5
    %v446 = vrot.slane %v212, 6
    %v447 = vor.u32 %v445, %v446
    %v448 = vsel %vm373, %v442, %v447
    %v449 = vrot.slane %v217, 5
    %v450 = vrot.slane %v220, 6
    %v451 = vor.u32 %v449, %v450
    %v452 = vrot.slane %v451, 4
    %v453 = vrot.slane %v230, 5
    %v454 = vrot.slane %v226, 6
    %v455 = vor.u32 %v453, %v454
    %v456 = vsel %vm373, %v452, %v455
    %v457 = vrot.slane %v455, 4
    %v458 = vshrl.u32 %v86, 16
    %v460 = vrot.slane %v458, 5
    %v461 = vrot.slane %v236, 6
    %v462 = vor.u32 %v460, %v461
    %v463 = vsel %vm373, %v457, %v462
    %v464 = vrot.slane %v241, 5
    %v465 = vrot.slane %v244, 6
    %v466 = vor.u32 %v464, %v465
    %v467 = vrot.slane %v466, 4
    %v468 = vrot.slane %v254, 5
    %v469 = vrot.slane %v250, 6
    %v470 = vor.u32 %v468, %v469
    %v471 = vsel %vm373, %v467, %v470
    %v472 = vrot.slane %v470, 4
    %v473 = vshrl.u32 %v89, 16
    %v475 = vrot.slane %v473, 5
    %v476 = vrot.slane %v260, 6
    %v477 = vor.u32 %v475, %v476
    %v478 = vsel %vm373, %v472, %v477
    %v479 = vrot.slane %v265, 5
    %v480 = vrot.slane %v268, 6
    %v481 = vor.u32 %v479, %v480
    %v482 = vrot.slane %v481, 4
    %v483 = vrot.slane %v278, 5
    %v484 = vrot.slane %v274, 6
    %v485 = vor.u32 %v483, %v484
    %v486 = vsel %vm373, %v482, %v485
    %v487 = vrot.slane %v485, 4
    %v488 = vshrl.u32 %v92, 16
    %v490 = vrot.slane %v488, 5
    %v491 = vrot.slane %v284, 6
    %v492 = vor.u32 %v490, %v491
    %v493 = vsel %vm373, %v487, %v492
    %vm494 = vcmask 1041408
    %vm495 = vcmask 1045508
    %vm496 = vmor %vm494, %vm495
    %v497 = vrot.slane %v69, 6
    %v498 = vrot.slane %v497, 4
    %v499 = vrot.slane %v70, 6
    %v500 = vsel %vm496, %v498, %v499
    %v501 = vrot.slane %v499, 4
    %v502 = vrot.slane %v71, 6
    %v503 = vsel %vm496, %v501, %v502
    %v504 = vrot.slane %v72, 6
    %v505 = vrot.slane %v504, 4
    %v506 = vrot.slane %v73, 6
    %v507 = vsel %vm496, %v505, %v506
    %v508 = vrot.slane %v506, 4
    %v509 = vrot.slane %v74, 6
    %v510 = vsel %vm496, %v508, %v509
    %v511 = vrot.slane %v75, 6
    %v512 = vrot.slane %v511, 4
    %v513 = vrot.slane %v76, 6
    %v514 = vsel %vm496, %v512, %v513
    %v515 = vrot.slane %v513, 4
    %v516 = vrot.slane %v77, 6
    %v517 = vsel %vm496, %v515, %v516
    %v518 = vrot.slane %v78, 6
    %v519 = vrot.slane %v518, 4
    %v520 = vrot.slane %v79, 6
    %v521 = vsel %vm496, %v519, %v520
    %v522 = vrot.slane %v520, 4
    %v523 = vrot.slane %v80, 6
    %v524 = vsel %vm496, %v522, %v523
    %v525 = vrot.slane %v81, 6
    %v526 = vrot.slane %v525, 4
    %v527 = vrot.slane %v82, 6
    %v528 = vsel %vm496, %v526, %v527
    %v529 = vrot.slane %v527, 4
    %v530 = vrot.slane %v83, 6
    %v531 = vsel %vm496, %v529, %v530
    %v532 = vrot.slane %v84, 6
    %v533 = vrot.slane %v532, 4
    %v534 = vrot.slane %v85, 6
    %v535 = vsel %vm496, %v533, %v534
    %v536 = vrot.slane %v534, 4
    %v537 = vrot.slane %v86, 6
    %v538 = vsel %vm496, %v536, %v537
    %v539 = vrot.slane %v87, 6
    %v540 = vrot.slane %v539, 4
    %v541 = vrot.slane %v88, 6
    %v542 = vsel %vm496, %v540, %v541
    %v543 = vrot.slane %v541, 4
    %v544 = vrot.slane %v89, 6
    %v545 = vsel %vm496, %v543, %v544
    %v546 = vrot.slane %v90, 6
    %v547 = vrot.slane %v546, 4
    %v548 = vrot.slane %v91, 6
    %v549 = vsel %vm496, %v547, %v548
    %v550 = vrot.slane %v548, 4
    %v551 = vrot.slane %v92, 6
    %v552 = vsel %vm496, %v550, %v551
    %v553 = vunpack.c.l.b16 %v69
    %v554 = vunpack.c.l.b16 %v70
    %v555 = vunpack.c.l.b16 %v72
    %v556 = vunpack.c.l.b16 %v73
    %v557 = vunpack.c.l.b16 %v75
    %v558 = vunpack.c.l.b16 %v76
    %v559 = vunpack.c.l.b16 %v78
    %v560 = vunpack.c.l.b16 %v79
    %v561 = vunpack.c.l.b16 %v81
    %v562 = vunpack.c.l.b16 %v82
    %v563 = vunpack.c.l.b16 %v84
    %v564 = vunpack.c.l.b16 %v85
    %v565 = vunpack.c.l.b16 %v87
    %v566 = vunpack.c.l.b16 %v88
    %v567 = vunpack.c.l.b16 %v90
    %v568 = vunpack.c.l.b16 %v91
    %v569 = vpack.c.b16 %v554, %v553
    %v570 = vpack.c.b16 %v556, %v555
    %v571 = vpack.c.b16 %v558, %v557
    %v572 = vpack.c.b16 %v560, %v559
    %v573 = vpack.c.b16 %v562, %v561
    %v574 = vpack.c.b16 %v564, %v563
    %v575 = vpack.c.b16 %v566, %v565
    %v576 = vpack.c.b16 %v568, %v567
    %v577 = vunpack.c.l.b16 %v109
    %v578 = vunpack.c.l.b16 %v119
    %v579 = vunpack.c.l.b16 %v133
    %v580 = vunpack.c.l.b16 %v143
    %v581 = vunpack.c.l.b16 %v157
    %v582 = vunpack.c.l.b16 %v167
    %v583 = vunpack.c.l.b16 %v181
    %v584 = vunpack.c.l.b16 %v191
    %v585 = vunpack.c.l.b16 %v205
    %v586 = vunpack.c.l.b16 %v215
    %v587 = vunpack.c.l.b16 %v229
    %v588 = vunpack.c.l.b16 %v239
    %v589 = vunpack.c.l.b16 %v253
    %v590 = vunpack.c.l.b16 %v263
    %v591 = vunpack.c.l.b16 %v277
    %v592 = vunpack.c.l.b16 %v287
    %v593 = vpack.c.b16 %v578, %v577
    %v594 = vpack.c.b16 %v580, %v579
    %v595 = vpack.c.b16 %v582, %v581
    %v596 = vpack.c.b16 %v584, %v583
    %v597 = vpack.c.b16 %v586, %v585
    %v598 = vpack.c.b16 %v588, %v587
    %v599 = vpack.c.b16 %v590, %v589
    %v600 = vpack.c.b16 %v592, %v591
    %601 = vrot.lane.b32.xlu0 %v593, 32
    %v602 = vpop.permute.xlu0 %601
    %603 = vrot.lane.b32.xlu0 %v594, 32
    %v604 = vpop.permute.xlu0 %603
    %605 = vrot.lane.b32.xlu0 %v595, 32
    %v606 = vpop.permute.xlu0 %605
    %607 = vrot.lane.b32.xlu0 %v596, 32
    %v608 = vpop.permute.xlu0 %607
    %609 = vrot.lane.b32.xlu0 %v597, 32
    %v610 = vpop.permute.xlu0 %609
    %611 = vrot.lane.b32.xlu0 %v598, 32
    %v612 = vpop.permute.xlu0 %611
    %613 = vrot.lane.b32.xlu0 %v599, 32
    %v614 = vpop.permute.xlu0 %613
    %615 = vrot.lane.b32.xlu0 %v600, 32
    %v616 = vpop.permute.xlu0 %615
    %v617 = vunpack.c.l.b16 %v318
    %v618 = vunpack.c.l.b16 %v321
    %v619 = vunpack.c.l.b16 %v325
    %v620 = vunpack.c.l.b16 %v328
    %v621 = vunpack.c.l.b16 %v332
    %v622 = vunpack.c.l.b16 %v335
    %v623 = vunpack.c.l.b16 %v339
    %v624 = vunpack.c.l.b16 %v342
    %v625 = vunpack.c.l.b16 %v346
    %v626 = vunpack.c.l.b16 %v349
    %v627 = vunpack.c.l.b16 %v353
    %v628 = vunpack.c.l.b16 %v356
    %v629 = vunpack.c.l.b16 %v360
    %v630 = vunpack.c.l.b16 %v363
    %v631 = vunpack.c.l.b16 %v367
    %v632 = vunpack.c.l.b16 %v370
    %v633 = vpack.c.b16 %v618, %v617
    %v634 = vpack.c.b16 %v620, %v619
    %v635 = vpack.c.b16 %v622, %v621
    %v636 = vpack.c.b16 %v624, %v623
    %v637 = vpack.c.b16 %v626, %v625
    %v638 = vpack.c.b16 %v628, %v627
    %v639 = vpack.c.b16 %v630, %v629
    %v640 = vpack.c.b16 %v632, %v631
    %641 = vrot.lane.b32.xlu0 %v633, 64
    %v642 = vpop.permute.xlu0 %641
    %643 = vrot.lane.b32.xlu0 %v634, 64
    %v644 = vpop.permute.xlu0 %643
    %645 = vrot.lane.b32.xlu0 %v635, 64
    %v646 = vpop.permute.xlu0 %645
    %647 = vrot.lane.b32.xlu0 %v636, 64
    %v648 = vpop.permute.xlu0 %647
    %649 = vrot.lane.b32.xlu0 %v637, 64
    %v650 = vpop.permute.xlu0 %649
    %651 = vrot.lane.b32.xlu0 %v638, 64
    %v652 = vpop.permute.xlu0 %651
    %653 = vrot.lane.b32.xlu0 %v639, 64
    %v654 = vpop.permute.xlu0 %653
    %655 = vrot.lane.b32.xlu0 %v640, 64
    %v656 = vpop.permute.xlu0 %655
    %v657 = vunpack.c.l.b16 %v381
    %v658 = vunpack.c.l.b16 %v388
    %v659 = vunpack.c.l.b16 %v396
    %v660 = vunpack.c.l.b16 %v403
    %v661 = vunpack.c.l.b16 %v411
    %v662 = vunpack.c.l.b16 %v418
    %v663 = vunpack.c.l.b16 %v426
    %v664 = vunpack.c.l.b16 %v433
    %v665 = vunpack.c.l.b16 %v441
    %v666 = vunpack.c.l.b16 %v448
    %v667 = vunpack.c.l.b16 %v456
    %v668 = vunpack.c.l.b16 %v463
    %v669 = vunpack.c.l.b16 %v471
    %v670 = vunpack.c.l.b16 %v478
    %v671 = vunpack.c.l.b16 %v486
    %v672 = vunpack.c.l.b16 %v493
    %v673 = vpack.c.b16 %v658, %v657
    %v674 = vpack.c.b16 %v660, %v659
    %v675 = vpack.c.b16 %v662, %v661
    %v676 = vpack.c.b16 %v664, %v663
    %v677 = vpack.c.b16 %v666, %v665
    %v678 = vpack.c.b16 %v668, %v667
    %v679 = vpack.c.b16 %v670, %v669
    %v680 = vpack.c.b16 %v672, %v671
    %681 = vrot.lane.b32.xlu0 %v673, 96
    %v682 = vpop.permute.xlu0 %681
    %683 = vrot.lane.b32.xlu0 %v674, 96
    %v684 = vpop.permute.xlu0 %683
    %685 = vrot.lane.b32.xlu0 %v675, 96
    %v686 = vpop.permute.xlu0 %685
    %687 = vrot.lane.b32.xlu0 %v676, 96
    %v688 = vpop.permute.xlu0 %687
    %689 = vrot.lane.b32.xlu0 %v677, 96
    %v690 = vpop.permute.xlu0 %689
    %691 = vrot.lane.b32.xlu0 %v678, 96
    %v692 = vpop.permute.xlu0 %691
    %693 = vrot.lane.b32.xlu0 %v679, 96
    %v694 = vpop.permute.xlu0 %693
    %695 = vrot.lane.b32.xlu0 %v680, 96
    %v696 = vpop.permute.xlu0 %695
    %v697 = vunpack.c.l.b16 %v500
    %v698 = vunpack.c.l.b16 %v503
    %v699 = vunpack.c.l.b16 %v507
    %v700 = vunpack.c.l.b16 %v510
    %v701 = vunpack.c.l.b16 %v514
    %v702 = vunpack.c.l.b16 %v517
    %v703 = vunpack.c.l.b16 %v521
    %v704 = vunpack.c.l.b16 %v524
    %v705 = vunpack.c.l.b16 %v528
    %v706 = vunpack.c.l.b16 %v531
    %v707 = vunpack.c.l.b16 %v535
    %v708 = vunpack.c.l.b16 %v538
    %v709 = vunpack.c.l.b16 %v542
    %v710 = vunpack.c.l.b16 %v545
    %v711 = vunpack.c.l.b16 %v549
    %v712 = vunpack.c.l.b16 %v552
    %v713 = vpack.c.b16 %v698, %v697
    %v714 = vpack.c.b16 %v700, %v699
    %v715 = vpack.c.b16 %v702, %v701
    %v716 = vpack.c.b16 %v704, %v703
    %v717 = vpack.c.b16 %v706, %v705
    %v718 = vpack.c.b16 %v708, %v707
    %v719 = vpack.c.b16 %v710, %v709
    %v720 = vpack.c.b16 %v712, %v711
    %vm721 = vcmask 261120
    %v724 = vsel %vm721, %v569, %v602
    %v727 = vsel %vm721, %v570, %v604
    %v730 = vsel %vm721, %v571, %v606
    %v733 = vsel %vm721, %v572, %v608
    %v736 = vsel %vm721, %v573, %v610
    %v739 = vsel %vm721, %v574, %v612
    %v742 = vsel %vm721, %v575, %v614
    %v745 = vsel %vm721, %v576, %v616
    %vm746 = vcmask 523264
    %v748 = vsel %vm746, %v724, %v642
    %v750 = vsel %vm746, %v727, %v644
    %v752 = vsel %vm746, %v730, %v646
    %v754 = vsel %vm746, %v733, %v648
    %v756 = vsel %vm746, %v736, %v650
    %v758 = vsel %vm746, %v739, %v652
    %v760 = vsel %vm746, %v742, %v654
    %v762 = vsel %vm746, %v745, %v656
    %vm763 = vcmask 785408
    %v765 = vsel %vm763, %v748, %v682
    %v768 = vsel %vm763, %v750, %v684
    %v771 = vsel %vm763, %v752, %v686
    %v774 = vsel %vm763, %v754, %v688
    %v777 = vsel %vm763, %v756, %v690
    %v780 = vsel %vm763, %v758, %v692
    %v783 = vsel %vm763, %v760, %v694
    %v786 = vsel %vm763, %v762, %v696
    %v788 = vld [vmem:[#allocation5] sm:$0xf]
    %v789 = vld [vmem:[#allocation5 + $0x4] sm:$0xf]
    %v790 = vld [vmem:[#allocation5 + $0x8] sm:$0xf]
    %v791 = vld [vmem:[#allocation5 + $0xc] sm:$0xf]
    %v792 = vld [vmem:[#allocation5 + $0x10] sm:$0xf]
    %v793 = vld [vmem:[#allocation5 + $0x14] sm:$0xf]
    %v794 = vld [vmem:[#allocation5 + $0x18] sm:$0xf]
    %v795 = vld [vmem:[#allocation5 + $0x1c] sm:$0xf]
    %v796 = vld [vmem:[#allocation5 + $0x20] sm:$0xf]
    %v797 = vld [vmem:[#allocation5 + $0x24] sm:$0xf]
    %v798 = vld [vmem:[#allocation5 + $0x28] sm:$0xf]
    %v799 = vld [vmem:[#allocation5 + $0x2c] sm:$0xf]
    %v800 = vld [vmem:[#allocation5 + $0x30] sm:$0xf]
    %v801 = vld [vmem:[#allocation5 + $0x34] sm:$0xf]
    %v802 = vld [vmem:[#allocation5 + $0x38] sm:$0xf]
    %v803 = vld [vmem:[#allocation5 + $0x3c] sm:$0xf]
    %v804 = vld [vmem:[#allocation5 + $0x40] sm:$0xf]
    %v805 = vld [vmem:[#allocation5 + $0x44] sm:$0xf]
    %v806 = vld [vmem:[#allocation5 + $0x48] sm:$0xf]
    %v807 = vld [vmem:[#allocation5 + $0x4c] sm:$0xf]
    %v808 = vld [vmem:[%s2] sm:$0x1]
    %v810 = vperm.slane %v808, 0
    %v832 = vunpack.c.l.b16 %v788
    %v833 = vunpack.c.l.b16 %v789
    %v834 = vunpack.c.l.b16 %v790
    %v835 = vunpack.c.l.b16 %v791
    %v836 = vunpack.c.l.b16 %v792
    %v837 = vunpack.c.l.b16 %v793
    %v838 = vunpack.c.l.b16 %v794
    %v839 = vunpack.c.l.b16 %v795
    %v840 = vunpack.c.l.b16 %v796
    %v841 = vunpack.c.l.b16 %v797
    %v842 = vunpack.c.l.b16 %v798
    %v843 = vunpack.c.l.b16 %v799
    %v844 = vunpack.c.l.b16 %v800
    %v845 = vunpack.c.l.b16 %v801
    %v846 = vunpack.c.l.b16 %v802
    %v847 = vunpack.c.l.b16 %v803
    %v848 = vunpack.c.l.b16 %v804
    %v849 = vunpack.c.l.b16 %v805
    %v850 = vunpack.c.l.b16 %v806
    %v851 = vunpack.c.l.b16 %v807
    %v852 = vpack.c.b16 %v833, %v832
    %v853 = vpack.c.b16 %v835, %v834
    %v854 = vpack.c.b16 %v837, %v836
    %v855 = vpack.c.b16 %v839, %v838
    %v856 = vpack.c.b16 %v841, %v840
    %v857 = vpack.c.b16 %v843, %v842
    %v858 = vpack.c.b16 %v845, %v844
    %v859 = vpack.c.b16 %v847, %v846
    %v860 = vpack.c.b16 %v849, %v848
    %v861 = vpack.c.b16 %v851, %v850
    %v873 = vsel %vm721, %v713, 0
    %v876 = vsel %vm721, %v714, 0
    %v879 = vsel %vm721, %v715, 0
    %v882 = vsel %vm721, %v716, 0
    %v885 = vsel %vm721, %v717, 0
    %v888 = vsel %vm721, %v718, 0
    %v891 = vsel %vm721, %v719, 0
    %v894 = vsel %vm721, %v720, 0
    %896 = vmatpush.bf16.msra.mxu0 %v859
    %897 = vmatpush.bf16.msra.mxu0 %v858
    %898 = vmatpush.bf16.msra.mxu0 %v857
    %899 = vmatpush.bf16.msra.mxu0 %v856
    %900 = vmatpush.bf16.msra.mxu0 %v855
    %901 = vmatpush.bf16.msra.mxu0 %v854
    %902 = vmatpush.bf16.msra.mxu0 %v853
    %903 = vmatpush.bf16.msra.mxu0 %v852
    %904 = vmatmul.bf16.gmra.mxu0 %v765
    %v905 = vpop.f32.mrf.mxu0
    %v906 = vadd.f32 %v810, %v905
    %v907 = vpop.f32.mrf.mxu0
    %v908 = vadd.f32 %v810, %v907
    %909 = vmatmul.bf16.gmra.mxu0 %v768
    %v910 = vpop.f32.mrf.mxu0
    %v911 = vadd.f32 %v810, %v910
    %v912 = vpop.f32.mrf.mxu0
    %v913 = vadd.f32 %v810, %v912
    %914 = vmatmul.bf16.gmra.mxu0 %v771
    %v915 = vpop.f32.mrf.mxu0
    %v916 = vadd.f32 %v810, %v915
    %v917 = vpop.f32.mrf.mxu0
    %v918 = vadd.f32 %v810, %v917
    %919 = vmatmul.bf16.gmra.mxu0 %v774
    %v920 = vpop.f32.mrf.mxu0
    %v921 = vadd.f32 %v810, %v920
    %v922 = vpop.f32.mrf.mxu0
    %v923 = vadd.f32 %v810, %v922
    %924 = vmatmul.bf16.gmra.mxu0 %v777
    %v925 = vpop.f32.mrf.mxu0
    %v926 = vadd.f32 %v810, %v925
    %v927 = vpop.f32.mrf.mxu0
    %v928 = vadd.f32 %v810, %v927
    %929 = vmatmul.bf16.gmra.mxu0 %v780
    %v930 = vpop.f32.mrf.mxu0
    %v931 = vadd.f32 %v810, %v930
    %v932 = vpop.f32.mrf.mxu0
    %v933 = vadd.f32 %v810, %v932
    %934 = vmatmul.bf16.gmra.mxu0 %v783
    %v935 = vpop.f32.mrf.mxu0
    %v936 = vadd.f32 %v810, %v935
    %v937 = vpop.f32.mrf.mxu0
    %v938 = vadd.f32 %v810, %v937
    %939 = vmatmul.bf16.gmra.mxu0 %v786
    %v940 = vpop.f32.mrf.mxu0
    %v941 = vadd.f32 %v810, %v940
    %v942 = vpop.f32.mrf.mxu0
    %v943 = vadd.f32 %v810, %v942
    %944 = vdwg.mxu0
    %945 = vmatpush.bf16.msra.mxu0 0
    %946 = vmatpush.bf16.msra.mxu0 0
    %947 = vmatpush.bf16.msra.mxu0 0
    %948 = vmatpush.bf16.msra.mxu0 0
    %949 = vmatpush.bf16.msra.mxu0 0
    %950 = vmatpush.bf16.msra.mxu0 0
    %951 = vmatpush.bf16.msra.mxu0 %v861
    %952 = vmatpush.bf16.msra.mxu0 %v860
    %953 = vmatmul.bf16.gmra.mxu0 %v873
    %v954 = vpop.f32.mrf.mxu0
    %v955 = vadd.f32 %v906, %v954
    %v956 = vpop.f32.mrf.mxu0
    %v957 = vadd.f32 %v908, %v956
    %958 = vmatmul.bf16.gmra.mxu0 %v876
    %v959 = vpop.f32.mrf.mxu0
    %v960 = vadd.f32 %v911, %v959
    %v961 = vpop.f32.mrf.mxu0
    %v962 = vadd.f32 %v913, %v961
    %963 = vmatmul.bf16.gmra.mxu0 %v879
    %v964 = vpop.f32.mrf.mxu0
    %v965 = vadd.f32 %v916, %v964
    %v966 = vpop.f32.mrf.mxu0
    %v967 = vadd.f32 %v918, %v966
    %968 = vmatmul.bf16.gmra.mxu0 %v882
    %v969 = vpop.f32.mrf.mxu0
    %v970 = vadd.f32 %v921, %v969
    %v971 = vpop.f32.mrf.mxu0
    %v972 = vadd.f32 %v923, %v971
    %973 = vmatmul.bf16.gmra.mxu0 %v885
    %v974 = vpop.f32.mrf.mxu0
    %v975 = vadd.f32 %v926, %v974
    %v976 = vpop.f32.mrf.mxu0
    %v977 = vadd.f32 %v928, %v976
    %978 = vmatmul.bf16.gmra.mxu0 %v888
    %v979 = vpop.f32.mrf.mxu0
    %v980 = vadd.f32 %v931, %v979
    %v981 = vpop.f32.mrf.mxu0
    %v982 = vadd.f32 %v933, %v981
    %983 = vmatmul.bf16.gmra.mxu0 %v891
    %v984 = vpop.f32.mrf.mxu0
    %v985 = vadd.f32 %v936, %v984
    %v986 = vpop.f32.mrf.mxu0
    %v987 = vadd.f32 %v938, %v986
    %988 = vmatmul.bf16.gmra.mxu0 %v894
    %v989 = vpop.f32.mrf.mxu0
    %v990 = vadd.f32 %v941, %v989
    %v991 = vpop.f32.mrf.mxu0
    %v992 = vadd.f32 %v943, %v991
    %993 = vdwg.mxu0
    %v994 = vmax.f32 %v955, 0.0
    %v995 = vmax.f32 %v957, 0.0
    %v996 = vmax.f32 %v960, 0.0
    %v997 = vmax.f32 %v962, 0.0
    %v998 = vmax.f32 %v965, 0.0
    %v999 = vmax.f32 %v967, 0.0
    %v1000 = vmax.f32 %v970, 0.0
    %v1001 = vmax.f32 %v972, 0.0
    %v1002 = vmax.f32 %v975, 0.0
    %v1003 = vmax.f32 %v977, 0.0
    %v1004 = vmax.f32 %v980, 0.0
    %v1005 = vmax.f32 %v982, 0.0
    %v1006 = vmax.f32 %v985, 0.0
    %v1007 = vmax.f32 %v987, 0.0
    %v1008 = vmax.f32 %v990, 0.0
    %v1009 = vmax.f32 %v992, 0.0
    %v1010 = vmax.f32 %v994, %v995
    %v1011 = vrot.slane %v1010, 4
    %v1012 = vmax.f32 %v1010, %v1011
    %v1013 = vrot.slane %v1012, 2
    %v1014 = vmax.f32 %v1012, %v1013
    %v1015 = vrot.slane %v1014, 1
    %v1016 = vmax.f32 %v1014, %v1015
    %v1017 = vmax.f32 %v996, %v997
    %v1018 = vrot.slane %v1017, 4
    %v1019 = vmax.f32 %v1017, %v1018
    %v1020 = vrot.slane %v1019, 2
    %v1021 = vmax.f32 %v1019, %v1020
    %v1022 = vrot.slane %v1021, 1
    %v1023 = vmax.f32 %v1021, %v1022
    %v1024 = vmax.f32 %v998, %v999
    %v1025 = vrot.slane %v1024, 4
    %v1026 = vmax.f32 %v1024, %v1025
    %v1027 = vrot.slane %v1026, 2
    %v1028 = vmax.f32 %v1026, %v1027
    %v1029 = vrot.slane %v1028, 1
    %v1030 = vmax.f32 %v1028, %v1029
    %v1031 = vmax.f32 %v1000, %v1001
    %v1032 = vrot.slane %v1031, 4
    %v1033 = vmax.f32 %v1031, %v1032
    %v1034 = vrot.slane %v1033, 2
    %v1035 = vmax.f32 %v1033, %v1034
    %v1036 = vrot.slane %v1035, 1
    %v1037 = vmax.f32 %v1035, %v1036
    %v1038 = vmax.f32 %v1002, %v1003
    %v1039 = vrot.slane %v1038, 4
    %v1040 = vmax.f32 %v1038, %v1039
    %v1041 = vrot.slane %v1040, 2
    %v1042 = vmax.f32 %v1040, %v1041
    %v1043 = vrot.slane %v1042, 1
    %v1044 = vmax.f32 %v1042, %v1043
    %v1045 = vmax.f32 %v1004, %v1005
    %v1046 = vrot.slane %v1045, 4
    %v1047 = vmax.f32 %v1045, %v1046
    %v1048 = vrot.slane %v1047, 2
    %v1049 = vmax.f32 %v1047, %v1048
    %v1050 = vrot.slane %v1049, 1
    %v1051 = vmax.f32 %v1049, %v1050
    %v1052 = vmax.f32 %v1006, %v1007
    %v1053 = vrot.slane %v1052, 4
    %v1054 = vmax.f32 %v1052, %v1053
    %v1055 = vrot.slane %v1054, 2
    %v1056 = vmax.f32 %v1054, %v1055
    %v1057 = vrot.slane %v1056, 1
    %v1058 = vmax.f32 %v1056, %v1057
    %v1059 = vmax.f32 %v1008, %v1009
    %v1060 = vrot.slane %v1059, 4
    %v1061 = vmax.f32 %v1059, %v1060
    %v1062 = vrot.slane %v1061, 2
    %v1063 = vmax.f32 %v1061, %v1062
    %v1064 = vrot.slane %v1063, 1
    %v1065 = vmax.f32 %v1063, %v1064
    %v1066 = vpack.c.bf16 %v1016, %v1016
    %v1067 = vpack.c.bf16 %v1023, %v1023
    %v1068 = vpack.c.bf16 %v1030, %v1030
    %v1069 = vpack.c.bf16 %v1037, %v1037
    %v1070 = vpack.c.bf16 %v1044, %v1044
    %v1071 = vpack.c.bf16 %v1051, %v1051
    %v1072 = vpack.c.bf16 %v1058, %v1058
    %v1073 = vpack.c.bf16 %v1065, %v1065
    %v1074 = vld [vmem:[#allocation7] sm:$0xf]
    %v1075 = vld [vmem:[#allocation7 + $0x4] sm:$0xf]
    %v1076 = vld [vmem:[#allocation7 + $0x8] sm:$0xf]
    %v1077 = vld [vmem:[#allocation7 + $0xc] sm:$0xf]
    %v1078 = vld [vmem:[#allocation7 + $0x10] sm:$0xf]
    %v1079 = vld [vmem:[#allocation7 + $0x14] sm:$0xf]
    %v1080 = vld [vmem:[#allocation7 + $0x18] sm:$0xf]
    %v1081 = vld [vmem:[#allocation7 + $0x1c] sm:$0xf]
    %v1082 = vld [vmem:[#allocation7 + $0x20] sm:$0xf]
    %v1083 = vld [vmem:[#allocation7 + $0x24] sm:$0xf]
    %v1084 = vld [vmem:[#allocation7 + $0x28] sm:$0xf]
    %v1085 = vld [vmem:[#allocation7 + $0x2c] sm:$0xf]
    %v1086 = vld [vmem:[#allocation7 + $0x30] sm:$0xf]
    %v1087 = vld [vmem:[#allocation7 + $0x34] sm:$0xf]
    %v1088 = vld [vmem:[#allocation7 + $0x38] sm:$0xf]
    %v1089 = vld [vmem:[#allocation7 + $0x3c] sm:$0xf]
    %v1090 = vld [vmem:[%s4] sm:$0x1]
    %v1092 = vperm.slane %v1090, 0
    %v1102 = vunpack.c.l.b16 %v1066
    %v1103 = vunpack.c.l.b16 %v1067
    %v1104 = vunpack.c.l.b16 %v1068
    %v1105 = vunpack.c.l.b16 %v1069
    %v1106 = vunpack.c.l.b16 %v1070
    %v1107 = vunpack.c.l.b16 %v1071
    %v1108 = vunpack.c.l.b16 %v1072
    %v1109 = vunpack.c.l.b16 %v1073
    %vm1110 = vcmask 1041409
    %v1111 = vsel %vm1110, %v1103, %v1102
    %vm1112 = vcmask 1042434
    %v1113 = vsel %vm1112, %v1104, %v1111
    %vm1114 = vcmask 1043459
    %v1115 = vsel %vm1114, %v1105, %v1113
    %vm1116 = vcmask 1044484
    %v1117 = vsel %vm1116, %v1106, %v1115
    %vm1118 = vcmask 1045509
    %v1119 = vsel %vm1118, %v1107, %v1117
    %vm1120 = vcmask 1046534
    %v1121 = vsel %vm1120, %v1108, %v1119
    %vm1122 = vcmask 1047559
    %v1123 = vsel %vm1122, %v1109, %v1121
    %v1124 = vpack.c.b16 %v1123, %v1123
    %v1142 = vunpack.c.l.b16 %v1074
    %v1143 = vunpack.c.l.b16 %v1075
    %v1144 = vunpack.c.l.b16 %v1076
    %v1145 = vunpack.c.l.b16 %v1077
    %v1146 = vunpack.c.l.b16 %v1078
    %v1147 = vunpack.c.l.b16 %v1079
    %v1148 = vunpack.c.l.b16 %v1080
    %v1149 = vunpack.c.l.b16 %v1081
    %v1150 = vunpack.c.l.b16 %v1082
    %v1151 = vunpack.c.l.b16 %v1083
    %v1152 = vunpack.c.l.b16 %v1084
    %v1153 = vunpack.c.l.b16 %v1085
    %v1154 = vunpack.c.l.b16 %v1086
    %v1155 = vunpack.c.l.b16 %v1087
    %v1156 = vunpack.c.l.b16 %v1088
    %v1157 = vunpack.c.l.b16 %v1089
    %v1158 = vpack.c.b16 %v1143, %v1142
    %v1159 = vpack.c.b16 %v1145, %v1144
    %v1160 = vpack.c.b16 %v1147, %v1146
    %v1161 = vpack.c.b16 %v1149, %v1148
    %v1162 = vpack.c.b16 %v1151, %v1150
    %v1163 = vpack.c.b16 %v1153, %v1152
    %v1164 = vpack.c.b16 %v1155, %v1154
    %v1165 = vpack.c.b16 %v1157, %v1156
    %1174 = vmatpush.bf16.msra.mxu0 %v1165
    %1175 = vmatpush.bf16.msra.mxu0 %v1164
    %1176 = vmatpush.bf16.msra.mxu0 %v1163
    %1177 = vmatpush.bf16.msra.mxu0 %v1162
    %1178 = vmatpush.bf16.msra.mxu0 %v1161
    %1179 = vmatpush.bf16.msra.mxu0 %v1160
    %1180 = vmatpush.bf16.msra.mxu0 %v1159
    %1181 = vmatpush.bf16.msra.mxu0 %v1158
    %1182 = vmatmul.bf16.gmra.mxu0 %v1124
    %v1183 = vpop.f32.mrf.mxu0
    %v1184 = vadd.f32 %v1092, %v1183
    %v1185 = vpop.f32.mrf.mxu0
    %1186 = vdwg.mxu0
    %1187 = vst [vmem:[#allocation8] sm:$0xff] %v1184
    // Predicated region
    $region34: #{tpu_custom_call.1} parent=1 // pred_check
      _
    $region35: #{tpu_custom_call.1} parent=1 // pred_check_branch
      %1189 = sbr.rel (0) target = $region37
    $region36: #{tpu_custom_call.1} parent=1 // pred_region
      %1191 = vsyncadd [#allocation4], 0
      %s1193 = sshll.u32 [#allocation8], 4
      %s1194 = int_to_ptr.vmem [resolvable:$true] %s1193
      %s1195 = sshll.u32 %s5, 4
      %s1196 = int_to_ptr.hbm [resolvable:$true] %s1195
      %1198 = dma.vmem_to_hbm [thread:$0]  %s1194, 128, %s1196, [#allocation4]
    $region37: #{tpu_custom_call.1} parent=1 // pred_fallthru
      _
    // Predicated region
    $region38: #{tpu_custom_call.1} parent=1 // pred_check
      _
    $region39: #{tpu_custom_call.1} parent=1 // pred_check_branch
      %1200 = sbr.rel (0) target = $region41
    $region40: #{tpu_custom_call.1} parent=1 // pred_region
      %1202 = dma.done [#allocation4], 128
    $region41: #{tpu_custom_call.1} parent=1 // pred_fallthru
      _
    %1203 = vsyncpa [#allocation3], 1
    %1204 = vsyncpa [#allocation6], 1
    %1205 = vsyncpa [#allocation4], 1

</llo_original>
